<compile_context>
chip_gen: v5e
topology: v5e:2x2
jax: 0.10.0
libtpu: 0.0.40
codegen_flags: <defaults>
</compile_context>

<pallas_src>
import jax
import jax.numpy as jnp
from jax import lax
from jax.experimental import pallas as pl
from jax.experimental.pallas import tpu as pltpu


def _mlp_kernel(x_ref, w1t_ref, b1_ref, w2r_ref, b2_ref, o_ref):
    # x_ref:   (TB, D)  native-layout batch tile
    # w1t_ref: (Hp, D)  fc1 weight transposed (hidden on sublanes), VMEM-resident
    # b1_ref:  (Hp, 1)  fc1 bias column
    # w2r_ref: (1, Hp)  fc2 weight row
    # b2_ref:  (1,)     fc2 bias scalar (SMEM)
    # o_ref:   (1, TB)  lane-dense output row
    x = x_ref[...].astype(w1t_ref.dtype)
    # fc1 on the MXU, contracting D on both operands: (Hp, D) x (TB, D) -> (Hp, TB).
    h = lax.dot_general(
        w1t_ref[...], x,
        dimension_numbers=(((1,), (1,)), ((), ())),
        preferred_element_type=jnp.float32,
    )
    # bias + ReLU on the VPU (padded hidden rows stay exactly zero).
    h = jnp.maximum(h + b1_ref[...], 0.0)
    # fc2 as a second MXU matmul: (1, Hp) @ (Hp, TB) -> (1, TB)  (f32 accumulate).
    out = jnp.dot(w2r_ref[...], h, preferred_element_type=jnp.float32)
    out = out + b2_ref[0]                                   # scalar bias from SMEM
    o_ref[...] = out.astype(o_ref.dtype)


def _round_up(x, m):
    return (x + m - 1) // m * m


def network_exploration_forward(x, w1, b1, w2, b2, *, tile_b=None,
                                compute_dtype=jnp.float32):
    """fc2(relu(fc1(x))).

    x: (B, D) f32; w1: (D, H); b1: (H,); w2: (H, 1) or (H,); b2: scalar-ish.
    Returns (B, 1) f32.
    """
    B, D = x.shape
    H = w1.shape[1]

    # ---- tiny wrapper-side weight plumbing (weights are small & reused) ------
    Hp = _round_up(H, 128)                       # pad hidden dim -> clean vregs
    w1t = jnp.zeros((Hp, D), compute_dtype).at[:H, :].set(
        w1.T.astype(compute_dtype))
    b1c = jnp.zeros((Hp, 1), jnp.float32).at[:H, 0].set(
        jnp.reshape(b1, (H,)).astype(jnp.float32))
    w2r = jnp.zeros((1, Hp), jnp.float32).at[0, :H].set(
        jnp.reshape(w2, (H,)).astype(jnp.float32))
    b2c = jnp.reshape(b2, (1,)).astype(jnp.float32)

    # ---- batch tiling ---------------------------------------------------------
    B_aligned = _round_up(B, 128)
    if tile_b is None:
        tile_b = min(2048, B_aligned)            # big tiles amortize step overhead
        # Keep >= 2 grid steps when the batch allows it so the "parallel" batch
        # axis actually shards across v7x's two TensorCores.
        if B_aligned >= 256 and tile_b >= B_aligned:
            tile_b = _round_up(B_aligned // 2, 128)
    tile_b = max(128, _round_up(tile_b, 128))
    B_pad = _round_up(B_aligned, tile_b)
    num_tiles = B_pad // tile_b

    # x stays in native (B, D) layout; pad batch only if it is not tile-aligned.
    x_in = x if B_pad == B else jnp.pad(x, ((0, B_pad - B), (0, 0)))

    out_row = pl.pallas_call(
        _mlp_kernel,
        out_shape=jax.ShapeDtypeStruct((1, B_pad), jnp.float32),
        grid_spec=pltpu.PrefetchScalarGridSpec(
            num_scalar_prefetch=0,
            grid=(num_tiles,),
            in_specs=[
                pl.BlockSpec((tile_b, D), lambda i: (i, 0)),        # native x tile
                pl.BlockSpec((Hp, D), lambda i: (0, 0)),            # fc1 W^T (resident)
                pl.BlockSpec((Hp, 1), lambda i: (0, 0)),            # fc1 bias column
                pl.BlockSpec((1, Hp), lambda i: (0, 0)),            # fc2 weight row
                pl.BlockSpec(memory_space=pltpu.MemorySpace.SMEM),  # fc2 bias scalar
            ],
            out_specs=pl.BlockSpec((1, tile_b), lambda i: (0, i)),
        ),
        compiler_params=pltpu.CompilerParams(
            dimension_semantics=("parallel",),   # batch axis megacore-shardable
        ),
    )(x_in, w1t, b1c, w2r, b2c)

    # Undo layout plumbing: (1, B_pad) -> (B, 1)
    return out_row[0, :B].reshape(B, 1)


def init_params(key, dim, hidden_size=100):
    """PyTorch nn.Linear-style init: U(-1/sqrt(fan_in), 1/sqrt(fan_in))."""
    k1, k2, k3, k4 = jax.random.split(key, 4)
    bound1 = 1.0 / jnp.sqrt(jnp.float32(dim))
    bound2 = 1.0 / jnp.sqrt(jnp.float32(hidden_size))
    w1 = jax.random.uniform(k1, (dim, hidden_size), jnp.float32, -bound1, bound1)
    b1 = jax.random.uniform(k2, (hidden_size,), jnp.float32, -bound1, bound1)
    w2 = jax.random.uniform(k3, (hidden_size, 1), jnp.float32, -bound2, bound2)
    b2 = jax.random.uniform(k4, (1,), jnp.float32, -bound2, bound2)
    return w1, b1, w2, b2


if __name__ == "__main__":
    key = jax.random.PRNGKey(0)
    kx, kp = jax.random.split(key)

    B, D, H = 16, 32, 100  # small shapes consistent with the module
    x = jax.random.normal(kx, (B, D), dtype=jnp.float32)
    w1, b1, w2, b2 = init_params(kp, D, H)

    out = network_exploration_forward(x, w1, b1, w2, b2)
    out = jax.block_until_ready(out)

    # pure-JAX reference check (f32 path)
    ref = jnp.maximum(x @ w1 + b1[None, :], 0.0) @ w2 + b2[None, :]
    assert out.shape == (B, 1)
    assert jnp.allclose(out, ref, atol=1e-5, rtol=1e-5), "mismatch vs reference"

    print("KERNEL_OK")
</pallas_src>

<mosaic_0001>
module attributes {stable_mosaic.version = 11 : i64} {
  func.func @_mlp_kernel(%arg0: i32, %arg1: memref<128x32xf32, #tpu.memory_space<vmem>>, %arg2: memref<128x32xf32, #tpu.memory_space<vmem>>, %arg3: memref<128x1xf32, #tpu.memory_space<vmem>>, %arg4: memref<1x128xf32, #tpu.memory_space<vmem>>, %arg5: memref<1xf32, #tpu.memory_space<smem>>, %arg6: memref<1x128xf32, #tpu.memory_space<vmem>>) attributes {dimension_semantics = [#tpu.dimension_semantics<parallel>], iteration_bounds = array<i64: 1>, scalar_prefetch = 0 : i64, scratch_operands = 0 : i64, tpu.core_type = #tpu.core_type<tc>, window_params = [{transform_indices = @transform_0, window_bounds = array<i64: 128, 32>}, {pipeline_mode = #tpu.pipeline_mode<synchronous>, transform_indices = @transform_1, window_bounds = array<i64: 128, 32>}, {pipeline_mode = #tpu.pipeline_mode<synchronous>, transform_indices = @transform_2, window_bounds = array<i64: 128, 1>}, {pipeline_mode = #tpu.pipeline_mode<synchronous>, transform_indices = @transform_3, window_bounds = array<i64: 1, 128>}, {transform_indices = @transform_4, window_bounds = array<i64: 1>}, {transform_indices = @transform_5, window_bounds = array<i64: 1, 128>}]} {
    %c0 = arith.constant 0 : index
    %c0_0 = arith.constant 0 : index
    %0 = vector.load %arg1[%c0, %c0_0] : memref<128x32xf32, #tpu.memory_space<vmem>>, vector<128x32xf32>
    %c0_1 = arith.constant 0 : index
    %c0_2 = arith.constant 0 : index
    %1 = vector.load %arg2[%c0_1, %c0_2] : memref<128x32xf32, #tpu.memory_space<vmem>>, vector<128x32xf32>
    %cst = arith.constant dense<0.000000e+00> : vector<128x128xf32>
    %2 = tpu.matmul %1, %0, %cst {dimension_numbers = #tpu.dot_dimension_numbers<[1], [1], [0], [0], [0, 0, 1, 0], [], []>} : vector<128x32xf32>, vector<128x32xf32>, vector<128x128xf32> -> vector<128x128xf32>
    %c0_3 = arith.constant 0 : index
    %c0_4 = arith.constant 0 : index
    %3 = vector.load %arg3[%c0_3, %c0_4] : memref<128x1xf32, #tpu.memory_space<vmem>>, vector<128x1xf32>
    %4 = vector.broadcast %3 : vector<128x1xf32> to vector<128x128xf32>
    %5 = arith.addf %2, %4 : vector<128x128xf32>
    %cst_5 = arith.constant 0.000000e+00 : f32
    %6 = vector.broadcast %cst_5 : f32 to vector<128x128xf32>
    %7 = arith.maximumf %5, %6 : vector<128x128xf32>
    %c0_6 = arith.constant 0 : index
    %c0_7 = arith.constant 0 : index
    %8 = vector.load %arg4[%c0_6, %c0_7] : memref<1x128xf32, #tpu.memory_space<vmem>>, vector<1x128xf32>
    %cst_8 = arith.constant dense<0.000000e+00> : vector<1x128xf32>
    %9 = tpu.matmul %8, %7, %cst_8 {dimension_numbers = #tpu.dot_dimension_numbers<[1], [0], [0], [1], [0, 0, 1, 1], [], []>} : vector<1x128xf32>, vector<128x128xf32>, vector<1x128xf32> -> vector<1x128xf32>
    %c0_9 = arith.constant 0 : index
    %10 = memref.load %arg5[%c0_9] : memref<1xf32, #tpu.memory_space<smem>>
    %11 = vector.broadcast %10 : f32 to vector<1x128xf32>
    %12 = arith.addf %9, %11 : vector<1x128xf32>
    %c0_10 = arith.constant 0 : index
    %c0_11 = arith.constant 0 : index
    %13 = vector.load %arg6[%c0_10, %c0_11] : memref<1x128xf32, #tpu.memory_space<vmem>>, vector<1x128xf32>
    tpu.vector_store %arg6[%c0_10, %c0_11], %12 {strides = array<i32>} : memref<1x128xf32, #tpu.memory_space<vmem>>, vector<1x128xf32>,
    return
  }
  func.func @transform_0(%arg0: i32) -> (i32, i32) {
    %c0_i32 = arith.constant 0 : i32
    %c0_i32_0 = arith.constant 0 : i32
    return %arg0, %c0_i32 : i32, i32
  }
  func.func @transform_1(%arg0: i32) -> (i32, i32) {
    %c0_i32 = arith.constant 0 : i32
    %c0_i32_0 = arith.constant 0 : i32
    %c0_i32_1 = arith.constant 0 : i32
    return %c0_i32, %c0_i32_0 : i32, i32
  }
  func.func @transform_2(%arg0: i32) -> (i32, i32) {
    %c0_i32 = arith.constant 0 : i32
    %c0_i32_0 = arith.constant 0 : i32
    %c0_i32_1 = arith.constant 0 : i32
    return %c0_i32, %c0_i32_0 : i32, i32
  }
  func.func @transform_3(%arg0: i32) -> (i32, i32) {
    %c0_i32 = arith.constant 0 : i32
    %c0_i32_0 = arith.constant 0 : i32
    %c0_i32_1 = arith.constant 0 : i32
    return %c0_i32, %c0_i32_0 : i32, i32
  }
  func.func @transform_4(%arg0: i32) -> i32 {
    %c0_i32 = arith.constant 0 : i32
    %c0_i32_0 = arith.constant 0 : i32
    return %c0_i32 : i32
  }
  func.func @transform_5(%arg0: i32) -> (i32, i32) {
    %c0_i32 = arith.constant 0 : i32
    %c0_i32_0 = arith.constant 0 : i32
    return %c0_i32, %arg0 : i32, i32
  }
}

</mosaic_0001>

<llo_original>
// kernel: tpu_custom_call.1
$region0: #{tpu_custom_call.1}
  #allocation0 [shape = 'u32[]', space=smem, size = 0x4, offset = 0x4, fixed_abs, tag = 'smem constant byte address 0x4 - core index']
  #allocation1 [shape = 'u32[72,128]{1,0:T(1,128)}', space=vmem, size = 0x9000, scoped, tag = 'internal scratch']
  #allocation2 [shape = 'f32[1]{0:T(128)S(6)}', space=smem, size = 0x200, scoped, tag = 'scoped memory for tpu_custom_call.1']
  %s0 = inlined_call_operand.vmem [shape: f32[128,32], index: 0, kind: input, shape index: {}]
  %s1 = inlined_call_operand.vmem [shape: f32[128,32], index: 1, kind: input, shape index: {}]
  %s2 = inlined_call_operand.vmem [shape: f32[128,1], index: 2, kind: input, shape index: {}]
  %s3 = inlined_call_operand.vmem [shape: f32[1,128], index: 3, kind: input, shape index: {}]
  %s4 = inlined_call_operand.<no memory space> [shape: f32[1], index: 4, kind: input, shape index: {}]
  %s5 = inlined_call_operand.hbm [shape: f32[1,128], index: 5, kind: output, shape index: {}]
  %s6 = sld [smem:[#allocation0]]
  $region30: #{tpu_custom_call.1} parent=0
    _
  %s8 = ssub.s32 1, %s6
  %s9 = scalar_select 0, %s8, %s6
  %10 = sst [smem:[#allocation2]] %s4
  $region1: #{tpu_custom_call.1} parent=0
    #allocation3 [shape = 'u8[512]{0}', space=vmem, size = 0x400, scoped, tag = 'output window, operand 0, single buffered']
    #allocation4 [shape = 's32[1]{0}', space=sflag, size = 0x4, scoped, tag = 'scoped memory for tpu_custom_call.1']
    %11 = vsyncpa [#allocation4], 0
    // Predicated region
    $region2: #{tpu_custom_call.1} parent=1 // pred_check
      _
    $region3: #{tpu_custom_call.1} parent=1 // pred_check_branch
      %13 = sbr.rel (0) target = $region5
    $region4: #{tpu_custom_call.1} parent=1 // pred_region
      _
    $region5: #{tpu_custom_call.1} parent=1 // pred_fallthru
      _
    // Predicated region
    $region6: #{tpu_custom_call.1} parent=1 // pred_check
      _
    $region7: #{tpu_custom_call.1} parent=1 // pred_check_branch
      %15 = sbr.rel (0) target = $region9
    $region8: #{tpu_custom_call.1} parent=1 // pred_region
      _
    $region9: #{tpu_custom_call.1} parent=1 // pred_fallthru
      _
    // Predicated region
    $region10: #{tpu_custom_call.1} parent=1 // pred_check
      _
    $region11: #{tpu_custom_call.1} parent=1 // pred_check_branch
      %17 = sbr.rel (0) target = $region13
    $region12: #{tpu_custom_call.1} parent=1 // pred_region
      _
    $region13: #{tpu_custom_call.1} parent=1 // pred_fallthru
      _
    // Predicated region
    $region14: #{tpu_custom_call.1} parent=1 // pred_check
      _
    $region15: #{tpu_custom_call.1} parent=1 // pred_check_branch
      %19 = sbr.rel (0) target = $region17
    $region16: #{tpu_custom_call.1} parent=1 // pred_region
      _
    $region17: #{tpu_custom_call.1} parent=1 // pred_fallthru
      _
    // Predicated region
    $region18: #{tpu_custom_call.1} parent=1 // pred_check
      _
    $region19: #{tpu_custom_call.1} parent=1 // pred_check_branch
      %21 = sbr.rel (0) target = $region21
    $region20: #{tpu_custom_call.1} parent=1 // pred_region
      _
    $region21: #{tpu_custom_call.1} parent=1 // pred_fallthru
      _
    %v22 = vld [vmem:[%s0] sm:$0xff]
    %v23 = vld [vmem:[%s0 + $0x8] sm:$0xff]
    %v24 = vld [vmem:[%s0 + $0x10] sm:$0xff]
    %v25 = vld [vmem:[%s0 + $0x18] sm:$0xff]
    %v26 = vld [vmem:[%s0 + $0x20] sm:$0xff]
    %v27 = vld [vmem:[%s0 + $0x28] sm:$0xff]
    %v28 = vld [vmem:[%s0 + $0x30] sm:$0xff]
    %v29 = vld [vmem:[%s0 + $0x38] sm:$0xff]
    %v30 = vld [vmem:[%s0 + $0x40] sm:$0xff]
    %v31 = vld [vmem:[%s0 + $0x48] sm:$0xff]
    %v32 = vld [vmem:[%s0 + $0x50] sm:$0xff]
    %v33 = vld [vmem:[%s0 + $0x58] sm:$0xff]
    %v34 = vld [vmem:[%s0 + $0x60] sm:$0xff]
    %v35 = vld [vmem:[%s0 + $0x68] sm:$0xff]
    %v36 = vld [vmem:[%s0 + $0x70] sm:$0xff]
    %v37 = vld [vmem:[%s0 + $0x78] sm:$0xff]
    %v38 = vld [vmem:[%s1] sm:$0xff]
    %v39 = vld [vmem:[%s1 + $0x8] sm:$0xff]
    %v40 = vld [vmem:[%s1 + $0x10] sm:$0xff]
    %v41 = vld [vmem:[%s1 + $0x18] sm:$0xff]
    %v42 = vld [vmem:[%s1 + $0x20] sm:$0xff]
    %v43 = vld [vmem:[%s1 + $0x28] sm:$0xff]
    %v44 = vld [vmem:[%s1 + $0x30] sm:$0xff]
    %v45 = vld [vmem:[%s1 + $0x38] sm:$0xff]
    %v46 = vld [vmem:[%s1 + $0x40] sm:$0xff]
    %v47 = vld [vmem:[%s1 + $0x48] sm:$0xff]
    %v48 = vld [vmem:[%s1 + $0x50] sm:$0xff]
    %v49 = vld [vmem:[%s1 + $0x58] sm:$0xff]
    %v50 = vld [vmem:[%s1 + $0x60] sm:$0xff]
    %v51 = vld [vmem:[%s1 + $0x68] sm:$0xff]
    %v52 = vld [vmem:[%s1 + $0x70] sm:$0xff]
    %v53 = vld [vmem:[%s1 + $0x78] sm:$0xff]
    %v54 = vld [vmem:[%s2] sm:$0xff]
    %v55 = vld [vmem:[%s2 + $0x8] sm:$0xff]
    %v56 = vld [vmem:[%s2 + $0x10] sm:$0xff]
    %v57 = vld [vmem:[%s2 + $0x18] sm:$0xff]
    %v58 = vld [vmem:[%s2 + $0x20] sm:$0xff]
    %v59 = vld [vmem:[%s2 + $0x28] sm:$0xff]
    %v60 = vld [vmem:[%s2 + $0x30] sm:$0xff]
    %v61 = vld [vmem:[%s2 + $0x38] sm:$0xff]
    %v62 = vld [vmem:[%s2 + $0x40] sm:$0xff]
    %v63 = vld [vmem:[%s2 + $0x48] sm:$0xff]
    %v64 = vld [vmem:[%s2 + $0x50] sm:$0xff]
    %v65 = vld [vmem:[%s2 + $0x58] sm:$0xff]
    %v66 = vld [vmem:[%s2 + $0x60] sm:$0xff]
    %v67 = vld [vmem:[%s2 + $0x68] sm:$0xff]
    %v68 = vld [vmem:[%s2 + $0x70] sm:$0xff]
    %v69 = vld [vmem:[%s2 + $0x78] sm:$0xff]
    %71 = vset.pattern.permute.xlu0 0
    %72 = vperm.xlu0 %71, %v54
    %v73 = vpop.permute.xlu0 %72
    %76 = vset.pattern.permute.xlu0 0
    %77 = vperm.xlu0 %76, %v55
    %v78 = vpop.permute.xlu0 %77
    %81 = vset.pattern.permute.xlu0 0
    %82 = vperm.xlu0 %81, %v56
    %v83 = vpop.permute.xlu0 %82
    %86 = vset.pattern.permute.xlu0 0
    %87 = vperm.xlu0 %86, %v57
    %v88 = vpop.permute.xlu0 %87
    %91 = vset.pattern.permute.xlu0 0
    %92 = vperm.xlu0 %91, %v58
    %v93 = vpop.permute.xlu0 %92
    %96 = vset.pattern.permute.xlu0 0
    %97 = vperm.xlu0 %96, %v59
    %v98 = vpop.permute.xlu0 %97
    %101 = vset.pattern.permute.xlu0 0
    %102 = vperm.xlu0 %101, %v60
    %v103 = vpop.permute.xlu0 %102
    %106 = vset.pattern.permute.xlu0 0
    %107 = vperm.xlu0 %106, %v61
    %v108 = vpop.permute.xlu0 %107
    %111 = vset.pattern.permute.xlu0 0
    %112 = vperm.xlu0 %111, %v62
    %v113 = vpop.permute.xlu0 %112
    %116 = vset.pattern.permute.xlu0 0
    %117 = vperm.xlu0 %116, %v63
    %v118 = vpop.permute.xlu0 %117
    %121 = vset.pattern.permute.xlu0 0
    %122 = vperm.xlu0 %121, %v64
    %v123 = vpop.permute.xlu0 %122
    %126 = vset.pattern.permute.xlu0 0
    %127 = vperm.xlu0 %126, %v65
    %v128 = vpop.permute.xlu0 %127
    %131 = vset.pattern.permute.xlu0 0
    %132 = vperm.xlu0 %131, %v66
    %v133 = vpop.permute.xlu0 %132
    %136 = vset.pattern.permute.xlu0 0
    %137 = vperm.xlu0 %136, %v67
    %v138 = vpop.permute.xlu0 %137
    %141 = vset.pattern.permute.xlu0 0
    %142 = vperm.xlu0 %141, %v68
    %v143 = vpop.permute.xlu0 %142
    %146 = vset.pattern.permute.xlu0 0
    %147 = vperm.xlu0 %146, %v69
    %v148 = vpop.permute.xlu0 %147
    %vm150 = vcmask 261120
    %v152 = vsel %vm150, %v38, 0
    %v155 = vsel %vm150, %v39, 0
    %v158 = vsel %vm150, %v40, 0
    %v161 = vsel %vm150, %v41, 0
    %v164 = vsel %vm150, %v42, 0
    %v167 = vsel %vm150, %v43, 0
    %v170 = vsel %vm150, %v44, 0
    %v173 = vsel %vm150, %v45, 0
    %v176 = vsel %vm150, %v46, 0
    %v179 = vsel %vm150, %v47, 0
    %v182 = vsel %vm150, %v48, 0
    %v185 = vsel %vm150, %v49, 0
    %v188 = vsel %vm150, %v50, 0
    %v191 = vsel %vm150, %v51, 0
    %v194 = vsel %vm150, %v52, 0
    %v197 = vsel %vm150, %v53, 0
    %v200 = vsel %vm150, %v22, 0
    %v203 = vsel %vm150, %v23, 0
    %v206 = vsel %vm150, %v24, 0
    %v209 = vsel %vm150, %v25, 0
    %v212 = vsel %vm150, %v26, 0
    %v215 = vsel %vm150, %v27, 0
    %v218 = vsel %vm150, %v28, 0
    %v221 = vsel %vm150, %v29, 0
    %v224 = vsel %vm150, %v30, 0
    %v227 = vsel %vm150, %v31, 0
    %v230 = vsel %vm150, %v32, 0
    %v233 = vsel %vm150, %v33, 0
    %v236 = vsel %vm150, %v34, 0
    %v239 = vsel %vm150, %v35, 0
    %v242 = vsel %vm150, %v36, 0
    %v245 = vsel %vm150, %v37, 0
    %247 = vmatpush.xpose.msra.mxu0 %v245
    %248 = vmatpush.xpose.msra.mxu0 %v242
    %249 = vmatpush.xpose.msra.mxu0 %v239
    %250 = vmatpush.xpose.msra.mxu0 %v236
    %251 = vmatpush.xpose.msra.mxu0 %v233
    %252 = vmatpush.xpose.msra.mxu0 %v230
    %253 = vmatpush.xpose.msra.mxu0 %v227
    %254 = vmatpush.xpose.msra.mxu0 %v224
    %255 = vmatpush.xpose.msra.mxu0 %v221
    %256 = vmatpush.xpose.msra.mxu0 %v218
    %257 = vmatpush.xpose.msra.mxu0 %v215
    %258 = vmatpush.xpose.msra.mxu0 %v212
    %259 = vmatpush.xpose.msra.mxu0 %v209
    %260 = vmatpush.xpose.msra.mxu0 %v206
    %261 = vmatpush.xpose.msra.mxu0 %v203
    %262 = vmatpush.xpose.msra.mxu0 %v200
    %263 = vmatmul.f32.gmra.mxu0 %v152
    %v264 = vpop.f32.mrf.mxu0
    %v265 = vadd.f32 %v73, %v264
    %266 = vmatmul.f32.gmra.mxu0 %v155
    %v267 = vpop.f32.mrf.mxu0
    %v268 = vadd.f32 %v78, %v267
    %269 = vmatmul.f32.gmra.mxu0 %v158
    %v270 = vpop.f32.mrf.mxu0
    %v271 = vadd.f32 %v83, %v270
    %272 = vmatmul.f32.gmra.mxu0 %v161
    %v273 = vpop.f32.mrf.mxu0
    %v274 = vadd.f32 %v88, %v273
    %275 = vmatmul.f32.gmra.mxu0 %v164
    %v276 = vpop.f32.mrf.mxu0
    %v277 = vadd.f32 %v93, %v276
    %278 = vmatmul.f32.gmra.mxu0 %v167
    %v279 = vpop.f32.mrf.mxu0
    %v280 = vadd.f32 %v98, %v279
    %281 = vmatmul.f32.gmra.mxu0 %v170
    %v282 = vpop.f32.mrf.mxu0
    %v283 = vadd.f32 %v103, %v282
    %284 = vmatmul.f32.gmra.mxu0 %v173
    %v285 = vpop.f32.mrf.mxu0
    %v286 = vadd.f32 %v108, %v285
    %287 = vmatmul.f32.gmra.mxu0 %v176
    %v288 = vpop.f32.mrf.mxu0
    %v289 = vadd.f32 %v113, %v288
    %290 = vmatmul.f32.gmra.mxu0 %v179
    %v291 = vpop.f32.mrf.mxu0
    %v292 = vadd.f32 %v118, %v291
    %293 = vmatmul.f32.gmra.mxu0 %v182
    %v294 = vpop.f32.mrf.mxu0
    %v295 = vadd.f32 %v123, %v294
    %296 = vmatmul.f32.gmra.mxu0 %v185
    %v297 = vpop.f32.mrf.mxu0
    %v298 = vadd.f32 %v128, %v297
    %299 = vmatmul.f32.gmra.mxu0 %v188
    %v300 = vpop.f32.mrf.mxu0
    %v301 = vadd.f32 %v133, %v300
    %302 = vmatmul.f32.gmra.mxu0 %v191
    %v303 = vpop.f32.mrf.mxu0
    %v304 = vadd.f32 %v138, %v303
    %305 = vmatmul.f32.gmra.mxu0 %v194
    %v306 = vpop.f32.mrf.mxu0
    %v307 = vadd.f32 %v143, %v306
    %308 = vmatmul.f32.gmra.mxu0 %v197
    %v309 = vpop.f32.mrf.mxu0
    %v310 = vadd.f32 %v148, %v309
    %311 = vdwg.mxu0
    %v312 = vmax.f32 %v265, 0.0
    %v313 = vmax.f32 %v268, 0.0
    %v314 = vmax.f32 %v271, 0.0
    %v315 = vmax.f32 %v274, 0.0
    %v316 = vmax.f32 %v277, 0.0
    %v317 = vmax.f32 %v280, 0.0
    %v318 = vmax.f32 %v283, 0.0
    %v319 = vmax.f32 %v286, 0.0
    %v320 = vmax.f32 %v289, 0.0
    %v321 = vmax.f32 %v292, 0.0
    %v322 = vmax.f32 %v295, 0.0
    %v323 = vmax.f32 %v298, 0.0
    %v324 = vmax.f32 %v301, 0.0
    %v325 = vmax.f32 %v304, 0.0
    %v326 = vmax.f32 %v307, 0.0
    %v327 = vmax.f32 %v310, 0.0
    %v328 = vld [vmem:[%s3] sm:$0x1]
    %s329 = sld [smem:[#allocation2]]
    %v330 = vstv %s329
    %331 = vmatpush.msra.mxu0 %v327
    %332 = vmatpush.msra.mxu0 %v326
    %333 = vmatpush.msra.mxu0 %v325
    %334 = vmatpush.msra.mxu0 %v324
    %335 = vmatpush.msra.mxu0 %v323
    %336 = vmatpush.msra.mxu0 %v322
    %337 = vmatpush.msra.mxu0 %v321
    %338 = vmatpush.msra.mxu0 %v320
    %339 = vmatpush.msra.mxu0 %v319
    %340 = vmatpush.msra.mxu0 %v318
    %341 = vmatpush.msra.mxu0 %v317
    %342 = vmatpush.msra.mxu0 %v316
    %343 = vmatpush.msra.mxu0 %v315
    %344 = vmatpush.msra.mxu0 %v314
    %345 = vmatpush.msra.mxu0 %v313
    %346 = vmatpush.msra.mxu0 %v312
    %347 = vmatmul.f32.gmra.mxu0 %v328
    %v348 = vpop.f32.mrf.mxu0
    %v349 = vadd.f32 %v330, %v348
    %350 = vdwg.mxu0
    %351 = vst [vmem:[#allocation3] sm:$0x1] %v349
    // Predicated region
    $region22: #{tpu_custom_call.1} parent=1 // pred_check
      _
    $region23: #{tpu_custom_call.1} parent=1 // pred_check_branch
      %353 = sbr.rel (0) target = $region25
    $region24: #{tpu_custom_call.1} parent=1 // pred_region
      %355 = vsyncadd [#allocation4], 0
      %s357 = sshll.u32 [#allocation3], 4
      %s358 = int_to_ptr.vmem [resolvable:$true] %s357
      %s359 = sshll.u32 %s5, 4
      %s360 = int_to_ptr.hbm [resolvable:$true] %s359
      %362 = dma.vmem_to_hbm [thread:$0]  %s358, 16, %s360, [#allocation4]
    $region25: #{tpu_custom_call.1} parent=1 // pred_fallthru
      _
    // Predicated region
    $region26: #{tpu_custom_call.1} parent=1 // pred_check
      _
    $region27: #{tpu_custom_call.1} parent=1 // pred_check_branch
      %364 = sbr.rel (0) target = $region29
    $region28: #{tpu_custom_call.1} parent=1 // pred_region
      %366 = dma.done [#allocation4], 16
    $region29: #{tpu_custom_call.1} parent=1 // pred_fallthru
      _
    %367 = vsyncpa [#allocation4], 1

</llo_original>
